<compile_context>
chip_gen: v7x
topology: tpu7x:2x2x1
jax: 0.10.0
libtpu: 0.0.40
codegen_flags: <defaults>
</compile_context>

<pallas_src>
import functools
import math

import jax
import jax.numpy as jnp
from jax.experimental import pallas as pl
from jax.experimental.pallas import tpu as pltpu


def _cdiv(a, b):
    return -(-a // b)


def _layernorm_kernel(x_ref, alpha_ref, bias_ref, o_ref, *, eps, feat):
    x = x_ref[...].astype(jnp.float32)                           # (TM, D)
    mean = jnp.mean(x, axis=-1, keepdims=True)                   # (TM, 1)
    xc = x - mean
    # torch.Tensor.std is unbiased by default -> divide by (D - 1).
    # feat == 1 gives NaN, exactly like torch (documented edge case).
    inv_nm1 = (1.0 / (feat - 1)) if feat > 1 else float("nan")
    var = jnp.sum(xc * xc, axis=-1, keepdims=True) * inv_nm1
    std = jnp.sqrt(var)
    # Exact per-row reciprocal on the (TM,1) column, broadcast-multiplied:
    # avoids a full (TM,D) divide while keeping exact numerics (1e-5 tol).
    inv = 1.0 / (std + eps)
    alpha = alpha_ref[0]                                          # SMEM scalar
    bias = bias_ref[0]                                            # SMEM scalar
    o_ref[...] = (alpha * (xc * inv) + bias).astype(o_ref.dtype)


def _choose_tile_and_vmem(n, d, dtype):
    """Pick a row-tile size and scoped-VMEM limit appropriate for this chip."""
    itemsize = jnp.dtype(dtype).itemsize
    sublane = {1: 32, 2: 16}.get(itemsize, 8)        # packed sublane multiple

    try:
        vmem_cap = int(pltpu.get_tpu_info().vmem_capacity_bytes)
    except Exception:
        vmem_cap = 64 << 20                           # conservative (v7x per-TC)

    # Live-bytes model: double-buffered in + out tiles in the native dtype
    # (4 * itemsize per element) plus ~3 f32 (TM, D) temporaries in the body.
    bytes_per_row = d * (4 * itemsize + 3 * 4)
    budget = min((vmem_cap * 3) // 8, 48 << 20)       # ~24 MiB v7x, ~48 MiB v5e/v6e
    tm = max(sublane, (budget // bytes_per_row) // sublane * sublane)

    # For big problems, cap the tile so the grid has >= ~8 steps (both v7x
    # TensorCores get work, pipeline stays overlapped), but never shrink the
    # tile below ~1 MiB of input rows.
    min_rows = max(sublane, ((1 << 20) // (d * itemsize)) // sublane * sublane)
    if n > 2 * min_rows:
        tm_steps = _cdiv(_cdiv(n, 8), sublane) * sublane
        tm = min(tm, max(tm_steps, min_rows))

    # Never larger than the (sublane-rounded) problem itself.
    n_rounded = _cdiv(n, sublane) * sublane
    tm = max(sublane, min(tm, n_rounded))

    # Raise the scoped limit only where physical VMEM allows (never past
    # half the chip's VMEM; stays at the 32 MiB default on v7x).
    vmem_limit = int(min(64 << 20, vmem_cap // 2))
    return tm, vmem_limit


@functools.partial(jax.jit, static_argnames=("eps",))
def layer_normalization(x, alpha, bias, *, eps=1e-6):
    """x: (..., d); alpha, bias: shape-(1,) scalar parameters."""
    orig_shape = x.shape
    d = orig_shape[-1]
    n = math.prod(orig_shape[:-1]) if len(orig_shape) > 1 else 1
    x2d = x.reshape(n, d)

    tm, vmem_limit = _choose_tile_and_vmem(n, d, x.dtype)
    grid = (pl.cdiv(n, tm),)

    itemsize = jnp.dtype(x.dtype).itemsize
    cost = pl.CostEstimate(
        flops=8 * n * d,                      # sub, sq, sums, mul, scale, shift
        transcendentals=2 * n,                # sqrt + reciprocal per row
        bytes_accessed=2 * n * d * itemsize + 8,
    )

    out2d = pl.pallas_call(
        functools.partial(_layernorm_kernel, eps=float(eps), feat=d),
        out_shape=jax.ShapeDtypeStruct((n, d), x.dtype),
        grid_spec=pltpu.PrefetchScalarGridSpec(
            num_scalar_prefetch=0,
            grid=grid,
            in_specs=[
                pl.BlockSpec((tm, d), lambda i: (i, 0)),               # x rows
                pl.BlockSpec(memory_space=pltpu.MemorySpace.SMEM),     # alpha
                pl.BlockSpec(memory_space=pltpu.MemorySpace.SMEM),     # bias
            ],
            out_specs=pl.BlockSpec((tm, d), lambda i: (i, 0)),
        ),
        compiler_params=pltpu.CompilerParams(
            dimension_semantics=("parallel",),
            vmem_limit_bytes=vmem_limit,
        ),
        cost_estimate=cost,
    )(
        x2d,
        alpha.reshape(1).astype(jnp.float32),
        bias.reshape(1).astype(jnp.float32),
    )
    return out2d.reshape(orig_shape)


def _reference(x, alpha, bias, eps):
    mean = x.mean(axis=-1, keepdims=True)
    std = jnp.std(x, axis=-1, keepdims=True, ddof=1)   # unbiased, like torch
    return alpha * (x - mean) / (std + eps) + bias


if __name__ == "__main__":
    eps = 1e-6
    key = jax.random.PRNGKey(0)

    # Primary small shape consistent with the module: (batch, seq, d_model).
    batch, seq, d_model = 2, 8, 128
    x = jax.random.normal(key, (batch, seq, d_model), jnp.float32)
    alpha = jnp.full((1,), 1.3, jnp.float32)   # non-trivial scale/shift so the
    bias = jnp.full((1,), 0.2, jnp.float32)    # affine path is exercised

    out = layer_normalization(x, alpha, bias, eps=eps)
    out = jax.block_until_ready(out)
    ref = _reference(x, alpha, bias, eps)
    assert out.shape == x.shape
    assert jnp.allclose(out, ref, atol=1e-5, rtol=1e-5), "mismatch vs reference"

    # Ragged row count (n not a multiple of the sublane tile) to exercise the
    # masked last block of the no-pad path.
    x2 = jax.random.normal(jax.random.PRNGKey(1), (3, 5, 128), jnp.float32)
    out2 = jax.block_until_ready(layer_normalization(x2, alpha, bias, eps=eps))
    ref2 = _reference(x2, alpha, bias, eps)
    assert jnp.allclose(out2, ref2, atol=1e-5, rtol=1e-5), "ragged mismatch"

    print("KERNEL_OK")
</pallas_src>

<mosaic_0001>
module attributes {stable_mosaic.version = 11 : i64} {
  func.func @_layernorm_kernel(%arg0: i32, %arg1: memref<16x128xf32, #tpu.memory_space<vmem>>, %arg2: memref<1xf32, #tpu.memory_space<smem>>, %arg3: memref<1xf32, #tpu.memory_space<smem>>, %arg4: memref<16x128xf32, #tpu.memory_space<vmem>>) attributes {dimension_semantics = [#tpu.dimension_semantics<parallel>], iteration_bounds = array<i64: 1>, scalar_prefetch = 0 : i64, scratch_operands = 0 : i64, tpu.core_type = #tpu.core_type<tc>, window_params = [{transform_indices = @transform_0, window_bounds = array<i64: 16, 128>}, {transform_indices = @transform_1, window_bounds = array<i64: 1>}, {transform_indices = @transform_2, window_bounds = array<i64: 1>}, {transform_indices = @transform_3, window_bounds = array<i64: 16, 128>}]} {
    %c0 = arith.constant 0 : index
    %c0_0 = arith.constant 0 : index
    %0 = vector.load %arg1[%c0, %c0_0] : memref<16x128xf32, #tpu.memory_space<vmem>>, vector<16x128xf32>
    %cst = arith.constant dense<0.000000e+00> : vector<16xf32>
    %1 = vector.multi_reduction <add>, %0, %cst [1] : vector<16x128xf32> to vector<16xf32>
    %2 = vector.shape_cast %1 : vector<16xf32> to vector<16x1xf32>
    %cst_1 = arith.constant 1.280000e+02 : f32
    %3 = vector.broadcast %cst_1 : f32 to vector<16x1xf32>
    %4 = arith.divf %2, %3 : vector<16x1xf32>
    %5 = vector.broadcast %4 : vector<16x1xf32> to vector<16x128xf32>
    %6 = arith.subf %0, %5 : vector<16x128xf32>
    %7 = arith.mulf %6, %6 : vector<16x128xf32>
    %cst_2 = arith.constant dense<0.000000e+00> : vector<16xf32>
    %8 = vector.multi_reduction <add>, %7, %cst_2 [1] : vector<16x128xf32> to vector<16xf32>
    %9 = vector.shape_cast %8 : vector<16xf32> to vector<16x1xf32>
    %cst_3 = arith.constant 0.00787401571 : f32
    %10 = vector.broadcast %cst_3 : f32 to vector<16x1xf32>
    %11 = arith.mulf %9, %10 : vector<16x1xf32>
    %12 = math.sqrt %11 : vector<16x1xf32>
    %cst_4 = arith.constant 9.99999997E-7 : f32
    %13 = vector.broadcast %cst_4 : f32 to vector<16x1xf32>
    %14 = arith.addf %12, %13 : vector<16x1xf32>
    %cst_5 = arith.constant 1.000000e+00 : f32
    %15 = vector.broadcast %cst_5 : f32 to vector<16x1xf32>
    %16 = arith.divf %15, %14 : vector<16x1xf32>
    %c0_6 = arith.constant 0 : index
    %17 = memref.load %arg2[%c0_6] : memref<1xf32, #tpu.memory_space<smem>>
    %c0_7 = arith.constant 0 : index
    %18 = memref.load %arg3[%c0_7] : memref<1xf32, #tpu.memory_space<smem>>
    %19 = vector.broadcast %16 : vector<16x1xf32> to vector<16x128xf32>
    %20 = arith.mulf %6, %19 : vector<16x128xf32>
    %21 = vector.broadcast %17 : f32 to vector<16x128xf32>
    %22 = arith.mulf %21, %20 : vector<16x128xf32>
    %23 = vector.broadcast %18 : f32 to vector<16x128xf32>
    %24 = arith.addf %22, %23 : vector<16x128xf32>
    %c0_8 = arith.constant 0 : index
    %c0_9 = arith.constant 0 : index
    %25 = vector.load %arg4[%c0_8, %c0_9] : memref<16x128xf32, #tpu.memory_space<vmem>>, vector<16x128xf32>
    tpu.vector_store %arg4[%c0_8, %c0_9], %24 {strides = array<i32>} : memref<16x128xf32, #tpu.memory_space<vmem>>, vector<16x128xf32>,
    return
  }
  func.func @transform_0(%arg0: i32) -> (i32, i32) {
    %c0_i32 = arith.constant 0 : i32
    %c0_i32_0 = arith.constant 0 : i32
    return %arg0, %c0_i32 : i32, i32
  }
  func.func @transform_1(%arg0: i32) -> i32 {
    %c0_i32 = arith.constant 0 : i32
    %c0_i32_0 = arith.constant 0 : i32
    return %c0_i32 : i32
  }
  func.func @transform_2(%arg0: i32) -> i32 {
    %c0_i32 = arith.constant 0 : i32
    %c0_i32_0 = arith.constant 0 : i32
    return %c0_i32 : i32
  }
  func.func @transform_3(%arg0: i32) -> (i32, i32) {
    %c0_i32 = arith.constant 0 : i32
    %c0_i32_0 = arith.constant 0 : i32
    return %arg0, %c0_i32 : i32, i32
  }
}

</mosaic_0001>

<llo_original>
// kernel: layer_normalization.1
$region0: #{layer_normalization.1}
  #allocation0 [shape = 'u32[]', space=smem, size = 0x4, offset = 0x4, fixed_abs, tag = 'smem constant byte address 0x4 - core index']
  #allocation1 [shape = 'u32[144,128]{1,0:T(1,128)}', space=vmem, size = 0x12000, scoped, tag = 'internal scratch']
  #allocation2 [shape = 'f32[1]{0:T(128)S(6)}', space=smem, size = 0x200, scoped, tag = 'scoped memory for layer_normalization.1']
  #allocation3 [shape = 'f32[1]{0:T(128)S(6)}', space=smem, size = 0x200, scoped, tag = 'scoped memory for layer_normalization.1']
  %s0 = inlined_call_operand.hbm [shape: f32[16,128], index: 0, kind: input, shape index: {}]
  %s1 = inlined_call_operand.<no memory space> [shape: f32[1], index: 1, kind: input, shape index: {}]
  %s2 = inlined_call_operand.<no memory space> [shape: f32[1], index: 2, kind: input, shape index: {}]
  %s3 = inlined_call_operand.hbm [shape: f32[16,128], index: 3, kind: output, shape index: {}]
  %s4 = sld [smem:[#allocation0]]
  $region26: #{layer_normalization.1} parent=0
    _
  %s6 = ssub.s32 1, %s4
  %s7 = scalar_select 0, %s6, %s4
  %8 = sst [smem:[#allocation2]] %s1
  %9 = sst [smem:[#allocation3]] %s2
  $region1: #{layer_normalization.1} parent=0
    #allocation4 [shape = 'u8[8192]{0}', space=vmem, size = 0x2000, scoped, tag = 'input window, operand 0, single buffered']
    #allocation5 [shape = 's32[1]{0}', space=sflag, size = 0x4, scoped, tag = 'scoped memory for layer_normalization.1']
    #allocation6 [shape = 's32[1]{0}', space=sflag, size = 0x4, scoped, tag = 'scoped memory for layer_normalization.1']
    #allocation7 [shape = 'u8[8192]{0}', space=vmem, size = 0x2000, scoped, tag = 'output window, operand 0, single buffered']
    %10 = vsyncpa [#allocation5], 0
    %11 = vsyncpa [#allocation6], 0
    // Predicated region
    $region2: #{layer_normalization.1} parent=1 // pred_check
      _
    $region3: #{layer_normalization.1} parent=1 // pred_check_branch
      %13 = sbr.rel (0) target = $region5
    $region4: #{layer_normalization.1} parent=1 // pred_region
      %s15 = ssub.s32 256, 256
      %16 = vsyncadd [#allocation5], %s15
      %s17 = sshll.u32 [#allocation4], 4
      %s18 = int_to_ptr.vmem [resolvable:$true] %s17
      %23 = dma.hbm_to_vmem [thread:$0]  %s0, 256, %s18, [#allocation5], 128, 128, 8
    $region5: #{layer_normalization.1} parent=1 // pred_fallthru
      _
    // Predicated region
    $region6: #{layer_normalization.1} parent=1 // pred_check
      _
    $region7: #{layer_normalization.1} parent=1 // pred_check_branch
      %25 = sbr.rel (0) target = $region9
    $region8: #{layer_normalization.1} parent=1 // pred_region
      _
    $region9: #{layer_normalization.1} parent=1 // pred_fallthru
      _
    // Predicated region
    $region10: #{layer_normalization.1} parent=1 // pred_check
      _
    $region11: #{layer_normalization.1} parent=1 // pred_check_branch
      %27 = sbr.rel (0) target = $region13
    $region12: #{layer_normalization.1} parent=1 // pred_region
      _
    $region13: #{layer_normalization.1} parent=1 // pred_fallthru
      _
    // Predicated region
    $region14: #{layer_normalization.1} parent=1 // pred_check
      _
    $region15: #{layer_normalization.1} parent=1 // pred_check_branch
      %29 = sbr.rel (0) target = $region17
    $region16: #{layer_normalization.1} parent=1 // pred_region
      %30 = dma.done [#allocation5], 256
    $region17: #{layer_normalization.1} parent=1 // pred_fallthru
      _
    %v31 = vld [vmem:[#allocation4] sm:$0xff]
    %v32 = vld [vmem:[#allocation4 + $0x8] sm:$0xff]
    %33 = vadd.xlane.f32.xlu0 %v31
    %v34 = vpop.xlane.xlu0 %33
    %35 = vadd.xlane.f32.xlu0 %v32
    %v36 = vpop.xlane.xlu0 %35
    %v37 = vrcp.pop 128.0
    %v38 = vmul.f32 %v34, %v37
    %v39 = vmul.f32 %v36, %v37
    %v40 = vsub.f32 %v31, %v38
    %v41 = vsub.f32 %v32, %v39
    %v42 = vmul.f32 %v40, %v40
    %v43 = vmul.f32 %v41, %v41
    %44 = vadd.xlane.f32.xlu0 %v42
    %v45 = vpop.xlane.xlu0 %44
    %46 = vadd.xlane.f32.xlu0 %v43
    %v47 = vpop.xlane.xlu0 %46
    %v48 = vmul.f32 %v45, 0.007874016
    %v49 = vmul.f32 %v47, 0.007874016
    %v50 = vrsqrt.pop %v48
    %v51 = vmul.f32 %v48, %v50
    %vm52 = vcmp.eq.f32.partialorder %v48, inf
    %v53 = vsel %vm52, %v48, %v51
    %vm54 = vcmp.eq.f32.partialorder %v48, 0.0
    %v55 = vand.u32 %v48, 2147483648
    %v56 = vsel %vm54, %v55, %v53
    %v57 = vrsqrt.pop %v49
    %v58 = vmul.f32 %v49, %v57
    %vm59 = vcmp.eq.f32.partialorder %v49, inf
    %v60 = vsel %vm59, %v49, %v58
    %vm61 = vcmp.eq.f32.partialorder %v49, 0.0
    %v62 = vand.u32 %v49, 2147483648
    %v63 = vsel %vm61, %v62, %v60
    %v64 = vadd.f32 %v56, 1e-06
    %v65 = vadd.f32 %v63, 1e-06
    %v66 = vrcp.pop %v64
    %v67 = vmul.f32 1.0, %v66
    %v68 = vrcp.pop %v65
    %v69 = vmul.f32 1.0, %v68
    %s70 = sld [smem:[#allocation2]]
    %s71 = sld [smem:[#allocation3]]
    %v72 = vmul.f32 %v40, %v67
    %v73 = vmul.f32 %v41, %v69
    %v74 = vstv %s70
    %v75 = vmul.f32 %v74, %v72
    %v76 = vmul.f32 %v74, %v73
    %v77 = vstv %s71
    %v78 = vadd.f32 %v75, %v77
    %v79 = vadd.f32 %v76, %v77
    %80 = vst [vmem:[#allocation7] sm:$0xff] %v78
    %81 = vst [vmem:[#allocation7 + $0x8] sm:$0xff] %v79
    // Predicated region
    $region18: #{layer_normalization.1} parent=1 // pred_check
      _
    $region19: #{layer_normalization.1} parent=1 // pred_check_branch
      %83 = sbr.rel (0) target = $region21
    $region20: #{layer_normalization.1} parent=1 // pred_region
      %s85 = ssub.s32 256, 256
      %86 = vsyncadd [#allocation6], %s85
      %s87 = sshll.u32 [#allocation7], 4
      %s88 = int_to_ptr.vmem [resolvable:$true] %s87
      %93 = dma.vmem_to_hbm [thread:$0]  %s88, 256, %s3, [#allocation6], 128, 128, 8
    $region21: #{layer_normalization.1} parent=1 // pred_fallthru
      _
    // Predicated region
    $region22: #{layer_normalization.1} parent=1 // pred_check
      _
    $region23: #{layer_normalization.1} parent=1 // pred_check_branch
      %95 = sbr.rel (0) target = $region25
    $region24: #{layer_normalization.1} parent=1 // pred_region
      %96 = dma.done [#allocation6], 256
    $region25: #{layer_normalization.1} parent=1 // pred_fallthru
      _
    %97 = vsyncpa [#allocation5], 1
    %98 = vsyncpa [#allocation6], 1

</llo_original>
